<compile_context>
chip_gen: v5e
topology: v5e:2x2
jax: 0.10.0
libtpu: 0.0.40
codegen_flags: <defaults>
</compile_context>

<pallas_src>
import jax
import jax.numpy as jnp
from jax.experimental import pallas as pl
from jax.experimental.pallas import tpu as pltpu


def seq2val_kernel(x2d_ref, xlast_ref, bhat_ref, c_ref, d_ref, w_ref, bias_ref,
                   out_ref, acc_ref):
    """Grid = (batch blocks ["parallel"], K blocks ["arbitrary"]).

    x2d_ref  : (tB, tK)      flat (d_in*L) slice of x in native NCL order
    xlast_ref: (tB, d_in)    x[:, :, -1]  (for the D skip term)
    bhat_ref : (tK, N)       lam-power-weighted input->state projection slice
    c_ref    : (N, d_out)    state->output projection (C^T)
    d_ref    : (d_in, d_out) skip projection (D^T)
    w_ref    : (d_out, 1)    Seq2Val output_layer weight^T
    bias_ref : (1, 1)        Seq2Val output_layer bias (SMEM scalar)
    out_ref  : (tB, 1)
    acc_ref  : (tB, N) f32   h_L accumulator across K blocks (VMEM scratch)
    """
    k = pl.program_id(1)

    @pl.when(k == 0)
    def _():
        acc_ref[...] = jnp.zeros_like(acc_ref)

    # Single MXU contraction per K block — replaces the L-step serial recurrence.
    acc_ref[...] += jnp.dot(x2d_ref[...], bhat_ref[...],
                            preferred_element_type=jnp.float32)

    @pl.when(k == pl.num_programs(1) - 1)
    def _():
        y_last = (jnp.dot(acc_ref[...], c_ref[...],
                          preferred_element_type=jnp.float32)
                  + jnp.dot(xlast_ref[...], d_ref[...],
                            preferred_element_type=jnp.float32))      # (tB, d_out)
        out_ref[...] = (jnp.dot(y_last, w_ref[...],
                                preferred_element_type=jnp.float32)
                        + bias_ref[0, 0])                             # (tB, 1)


def seq2val_forward(x_ncl, lam, bm_t, c_t, d_t, w_t, bias,
                    *, max_tile_k=512, max_tile_b=128):
    """x_ncl: (B, d_input, L) — PyTorch-style NCL layout. Returns (B, 1)."""
    B, d_in, L = x_ncl.shape
    n_state = lam.shape[-1]
    d_out = c_t.shape[-1]
    K = d_in * L

    # Fold lam powers into the input projection (only h_L is needed by Seq2Val):
    #   Bhat[k*L + t, n] = bm_t[k, n] * lam[n]^(L-1-t)
    exponents = (L - 1 - jnp.arange(L, dtype=jnp.float32))[:, None]        # (L, 1)
    powers = lam.reshape(1, n_state) ** exponents                          # (L, N)
    bhat = (bm_t[:, None, :] * powers[None, :, :]).reshape(K, n_state)     # (d_in*L, N)

    # Native NCL layout: a row-major reshape matches Bhat's (k, t) flattening.
    # No physical transpose → no extra HBM round trip.
    x2d = x_ncl.reshape(B, K)
    x_last = x_ncl[:, :, L - 1]                                            # (B, d_in)

    tile_b = B if B <= max_tile_b else max_tile_b
    tile_k = K if K <= max_tile_k else max_tile_k
    assert B % tile_b == 0, (B, tile_b)
    assert K % tile_k == 0, (K, tile_k)
    grid = (B // tile_b, K // tile_k)

    return pl.pallas_call(
        seq2val_kernel,
        out_shape=jax.ShapeDtypeStruct((B, 1), jnp.float32),
        grid=grid,
        in_specs=[
            pl.BlockSpec((tile_b, tile_k), lambda i, k: (i, k)),       # x2d
            pl.BlockSpec((tile_b, d_in), lambda i, k: (i, 0)),         # x_last
            pl.BlockSpec((tile_k, n_state), lambda i, k: (k, 0)),      # Bhat
            pl.BlockSpec((n_state, d_out), lambda i, k: (0, 0)),       # C^T
            pl.BlockSpec((d_in, d_out), lambda i, k: (0, 0)),          # D^T
            pl.BlockSpec((d_out, 1), lambda i, k: (0, 0)),             # W^T
            pl.BlockSpec(memory_space=pltpu.MemorySpace.SMEM),         # bias scalar
        ],
        out_specs=pl.BlockSpec((tile_b, 1), lambda i, k: (i, 0)),
        scratch_shapes=[pltpu.VMEM((tile_b, n_state), jnp.float32)],
        compiler_params=pltpu.CompilerParams(
            dimension_semantics=("parallel", "arbitrary")),
    )(x2d, x_last, bhat, c_t, d_t, w_t, bias)


def seq2val_reference(x_ncl, lam, bm_t, c_t, d_t, w_t, bias):
    """Pure-JAX reference with the original recurrence semantics."""
    B, d_in, L = x_ncl.shape
    h = jnp.zeros((B, lam.shape[-1]), jnp.float32)
    for t in range(L):
        h = lam * h + x_ncl[:, :, t] @ bm_t
    y_last = h @ c_t + x_ncl[:, :, -1] @ d_t      # == y[:, :, -1] of the SSM output
    return y_last @ w_t + bias


if __name__ == "__main__":
    # Small shapes consistent with the module's forward.
    B, d_in, L = 2, 4, 16          # x: (batch, d_input, seq_len)
    n_state, d_out = 32, 8         # SSM state size, model.d_output

    key = jax.random.PRNGKey(0)
    kx, kb, kc, kd, kw, kbias = jax.random.split(key, 6)

    x = jax.random.normal(kx, (B, d_in, L), dtype=jnp.float32)

    # Deterministic stand-in SSM parameters.
    lam = jnp.exp(-jnp.linspace(0.05, 1.0, n_state, dtype=jnp.float32))[None, :]  # (1, N)
    bm_t = 0.1 * jax.random.normal(kb, (d_in, n_state), dtype=jnp.float32)        # B^T
    c_t = 0.1 * jax.random.normal(kc, (n_state, d_out), dtype=jnp.float32)        # C^T
    d_t = 0.1 * jax.random.normal(kd, (d_in, d_out), dtype=jnp.float32)           # D^T

    # Seq2Val output layer: nn.Linear(d_output, 1)
    w_t = jax.random.normal(kw, (d_out, 1), dtype=jnp.float32) / jnp.sqrt(d_out)  # weight^T
    bias = jax.random.normal(kbias, (1, 1), dtype=jnp.float32) * 0.01             # bias

    out = seq2val_forward(x, lam, bm_t, c_t, d_t, w_t, bias)
    out = jax.block_until_ready(out)

    ref = seq2val_reference(x, lam, bm_t, c_t, d_t, w_t, bias)
    assert out.shape == (B, 1), out.shape
    assert jnp.allclose(out, ref, atol=1e-4, rtol=1e-4), (out, ref)

    print("KERNEL_OK")
</pallas_src>

<mosaic_0001>
module attributes {stable_mosaic.version = 11 : i64} {
  func.func @seq2val_kernel(%arg0: i32, %arg1: i32, %arg2: memref<2x64xf32, #tpu.memory_space<vmem>>, %arg3: memref<2x4xf32, #tpu.memory_space<vmem>>, %arg4: memref<64x32xf32, #tpu.memory_space<vmem>>, %arg5: memref<32x8xf32, #tpu.memory_space<vmem>>, %arg6: memref<4x8xf32, #tpu.memory_space<vmem>>, %arg7: memref<8x1xf32, #tpu.memory_space<vmem>>, %arg8: memref<1x1xf32, #tpu.memory_space<smem>>, %arg9: memref<2x1xf32, #tpu.memory_space<vmem>>, %arg10: memref<2x32xf32, #tpu.memory_space<vmem>>) attributes {dimension_semantics = [#tpu.dimension_semantics<parallel>, #tpu.dimension_semantics<arbitrary>], iteration_bounds = array<i64: 1, 1>, scalar_prefetch = 0 : i64, scratch_operands = 1 : i64, tpu.core_type = #tpu.core_type<tc>, window_params = [{transform_indices = @transform_0, window_bounds = array<i64: 2, 64>}, {transform_indices = @transform_1, window_bounds = array<i64: 2, 4>}, {transform_indices = @transform_2, window_bounds = array<i64: 64, 32>}, {pipeline_mode = #tpu.pipeline_mode<synchronous>, transform_indices = @transform_3, window_bounds = array<i64: 32, 8>}, {pipeline_mode = #tpu.pipeline_mode<synchronous>, transform_indices = @transform_4, window_bounds = array<i64: 4, 8>}, {pipeline_mode = #tpu.pipeline_mode<synchronous>, transform_indices = @transform_5, window_bounds = array<i64: 8, 1>}, {transform_indices = @transform_6, window_bounds = array<i64: 1, 1>}, {transform_indices = @transform_7, window_bounds = array<i64: 2, 1>}]} {
    %c0_i32 = arith.constant 0 : i32
    %0 = arith.cmpi eq, %arg1, %c0_i32 : i32
    %1 = arith.extui %0 : i1 to i32
    %c0_i32_0 = arith.constant 0 : i32
    %2 = arith.cmpi ne, %1, %c0_i32_0 : i32
    scf.if %2 {
      %cst_10 = arith.constant 0.000000e+00 : f32
      %12 = vector.broadcast %cst_10 : f32 to vector<2x32xf32>
      %c0_11 = arith.constant 0 : index
      %c0_12 = arith.constant 0 : index
      %13 = vector.load %arg10[%c0_11, %c0_12] : memref<2x32xf32, #tpu.memory_space<vmem>>, vector<2x32xf32>
      tpu.vector_store %arg10[%c0_11, %c0_12], %12 {strides = array<i32>} : memref<2x32xf32, #tpu.memory_space<vmem>>, vector<2x32xf32>,
    } else {
    }
    %c0 = arith.constant 0 : index
    %c0_1 = arith.constant 0 : index
    %3 = vector.load %arg10[%c0, %c0_1] : memref<2x32xf32, #tpu.memory_space<vmem>>, vector<2x32xf32>
    %c0_2 = arith.constant 0 : index
    %c0_3 = arith.constant 0 : index
    %4 = vector.load %arg2[%c0_2, %c0_3] : memref<2x64xf32, #tpu.memory_space<vmem>>, vector<2x64xf32>
    %c0_4 = arith.constant 0 : index
    %c0_5 = arith.constant 0 : index
    %5 = vector.load %arg4[%c0_4, %c0_5] : memref<64x32xf32, #tpu.memory_space<vmem>>, vector<64x32xf32>
    %cst = arith.constant dense<0.000000e+00> : vector<2x32xf32>
    %6 = tpu.matmul %4, %5, %cst {dimension_numbers = #tpu.dot_dimension_numbers<[1], [0], [0], [1], [0, 0, 1, 1], [], []>} : vector<2x64xf32>, vector<64x32xf32>, vector<2x32xf32> -> vector<2x32xf32>
    %7 = arith.addf %3, %6 : vector<2x32xf32>
    %c0_6 = arith.constant 0 : index
    %c0_7 = arith.constant 0 : index
    %8 = vector.load %arg10[%c0_6, %c0_7] : memref<2x32xf32, #tpu.memory_space<vmem>>, vector<2x32xf32>
    tpu.vector_store %arg10[%c0_6, %c0_7], %7 {strides = array<i32>} : memref<2x32xf32, #tpu.memory_space<vmem>>, vector<2x32xf32>,
    %c0_i32_8 = arith.constant 0 : i32
    %9 = arith.cmpi eq, %arg1, %c0_i32_8 : i32
    %10 = arith.extui %9 : i1 to i32
    %c0_i32_9 = arith.constant 0 : i32
    %11 = arith.cmpi ne, %10, %c0_i32_9 : i32
    scf.if %11 {
      %c0_10 = arith.constant 0 : index
      %c0_11 = arith.constant 0 : index
      %12 = vector.load %arg10[%c0_10, %c0_11] : memref<2x32xf32, #tpu.memory_space<vmem>>, vector<2x32xf32>
      %c0_12 = arith.constant 0 : index
      %c0_13 = arith.constant 0 : index
      %13 = vector.load %arg5[%c0_12, %c0_13] : memref<32x8xf32, #tpu.memory_space<vmem>>, vector<32x8xf32>
      %cst_14 = arith.constant dense<0.000000e+00> : vector<2x8xf32>
      %14 = tpu.matmul %12, %13, %cst_14 {dimension_numbers = #tpu.dot_dimension_numbers<[1], [0], [0], [1], [0, 0, 1, 1], [], []>} : vector<2x32xf32>, vector<32x8xf32>, vector<2x8xf32> -> vector<2x8xf32>
      %c0_15 = arith.constant 0 : index
      %c0_16 = arith.constant 0 : index
      %15 = vector.load %arg3[%c0_15, %c0_16] : memref<2x4xf32, #tpu.memory_space<vmem>>, vector<2x4xf32>
      %c0_17 = arith.constant 0 : index
      %c0_18 = arith.constant 0 : index
      %16 = vector.load %arg6[%c0_17, %c0_18] : memref<4x8xf32, #tpu.memory_space<vmem>>, vector<4x8xf32>
      %cst_19 = arith.constant dense<0.000000e+00> : vector<2x8xf32>
      %17 = tpu.matmul %15, %16, %cst_19 {dimension_numbers = #tpu.dot_dimension_numbers<[1], [0], [0], [1], [0, 0, 1, 1], [], []>} : vector<2x4xf32>, vector<4x8xf32>, vector<2x8xf32> -> vector<2x8xf32>
      %18 = arith.addf %14, %17 : vector<2x8xf32>
      %c0_20 = arith.constant 0 : index
      %c0_21 = arith.constant 0 : index
      %19 = vector.load %arg7[%c0_20, %c0_21] : memref<8x1xf32, #tpu.memory_space<vmem>>, vector<8x1xf32>
      %cst_22 = arith.constant dense<0.000000e+00> : vector<2x1xf32>
      %20 = tpu.matmul %18, %19, %cst_22 {dimension_numbers = #tpu.dot_dimension_numbers<[1], [0], [0], [1], [0, 0, 1, 1], [], []>} : vector<2x8xf32>, vector<8x1xf32>, vector<2x1xf32> -> vector<2x1xf32>
      %c0_23 = arith.constant 0 : index
      %c0_24 = arith.constant 0 : index
      %21 = memref.load %arg8[%c0_23, %c0_24] : memref<1x1xf32, #tpu.memory_space<smem>>
      %22 = vector.broadcast %21 : f32 to vector<2x1xf32>
      %23 = arith.addf %20, %22 : vector<2x1xf32>
      %c0_25 = arith.constant 0 : index
      %c0_26 = arith.constant 0 : index
      %24 = vector.load %arg9[%c0_25, %c0_26] : memref<2x1xf32, #tpu.memory_space<vmem>>, vector<2x1xf32>
      tpu.vector_store %arg9[%c0_25, %c0_26], %23 {strides = array<i32>} : memref<2x1xf32, #tpu.memory_space<vmem>>, vector<2x1xf32>,
    } else {
    }
    return
  }
  func.func @transform_0(%arg0: i32, %arg1: i32) -> (i32, i32) {
    %c0_i32 = arith.constant 0 : i32
    return %arg0, %arg1 : i32, i32
  }
  func.func @transform_1(%arg0: i32, %arg1: i32) -> (i32, i32) {
    %c0_i32 = arith.constant 0 : i32
    %c0_i32_0 = arith.constant 0 : i32
    return %arg0, %c0_i32 : i32, i32
  }
  func.func @transform_2(%arg0: i32, %arg1: i32) -> (i32, i32) {
    %c0_i32 = arith.constant 0 : i32
    %c0_i32_0 = arith.constant 0 : i32
    return %arg1, %c0_i32 : i32, i32
  }
  func.func @transform_3(%arg0: i32, %arg1: i32) -> (i32, i32) {
    %c0_i32 = arith.constant 0 : i32
    %c0_i32_0 = arith.constant 0 : i32
    %c0_i32_1 = arith.constant 0 : i32
    return %c0_i32, %c0_i32_0 : i32, i32
  }
  func.func @transform_4(%arg0: i32, %arg1: i32) -> (i32, i32) {
    %c0_i32 = arith.constant 0 : i32
    %c0_i32_0 = arith.constant 0 : i32
    %c0_i32_1 = arith.constant 0 : i32
    return %c0_i32, %c0_i32_0 : i32, i32
  }
  func.func @transform_5(%arg0: i32, %arg1: i32) -> (i32, i32) {
    %c0_i32 = arith.constant 0 : i32
    %c0_i32_0 = arith.constant 0 : i32
    %c0_i32_1 = arith.constant 0 : i32
    return %c0_i32, %c0_i32_0 : i32, i32
  }
  func.func @transform_6(%arg0: i32, %arg1: i32) -> (i32, i32) {
    %c0_i32 = arith.constant 0 : i32
    %c0_i32_0 = arith.constant 0 : i32
    %c0_i32_1 = arith.constant 0 : i32
    return %c0_i32, %c0_i32_0 : i32, i32
  }
  func.func @transform_7(%arg0: i32, %arg1: i32) -> (i32, i32) {
    %c0_i32 = arith.constant 0 : i32
    %c0_i32_0 = arith.constant 0 : i32
    return %arg0, %c0_i32 : i32, i32
  }
}

</mosaic_0001>

<llo_original>
// kernel: tpu_custom_call.1
$region0: #{tpu_custom_call.1}
  #allocation0 [shape = 'u32[]', space=smem, size = 0x4, offset = 0x4, fixed_abs, tag = 'smem constant byte address 0x4 - core index']
  #allocation1 [shape = 'u32[72,128]{1,0:T(1,128)}', space=vmem, size = 0x9000, scoped, tag = 'internal scratch']
  #allocation2 [shape = 'f32[2,32]{1,0:T(2,128)}', space=vmem, size = 0x400, scoped, tag = 'scratch operand']
  #allocation3 [shape = 'f32[1,1]{1,0:T(1,128)S(6)}', space=smem, size = 0x200, scoped, tag = 'scoped memory for tpu_custom_call.1']
  %s0 = inlined_call_operand.vmem [shape: f32[2,64], index: 0, kind: input, shape index: {}]
  %s1 = inlined_call_operand.vmem [shape: f32[2,4], index: 1, kind: input, shape index: {}]
  %s2 = inlined_call_operand.vmem [shape: f32[64,32], index: 2, kind: input, shape index: {}]
  %s3 = inlined_call_operand.vmem [shape: f32[32,8], index: 3, kind: input, shape index: {}]
  %s4 = inlined_call_operand.vmem [shape: f32[4,8], index: 4, kind: input, shape index: {}]
  %s5 = inlined_call_operand.vmem [shape: f32[8,1], index: 5, kind: input, shape index: {}]
  %s6 = inlined_call_operand.<no memory space> [shape: f32[1,1], index: 6, kind: input, shape index: {}]
  %s7 = inlined_call_operand.vmem [shape: f32[2,1], index: 7, kind: output, shape index: {}]
  %s8 = sld [smem:[#allocation0]]
  $region46: #{tpu_custom_call.1} parent=0
    _
  %s10 = ssub.s32 1, %s8
  %s11 = scalar_select 0, %s10, %s8
  %12 = sst [smem:[#allocation3]] %s6
  // Predicated region
  $region2: #{tpu_custom_call.1} parent=0 // pred_check
    _
  $region3: #{tpu_custom_call.1} parent=0 // pred_check_branch
    %14 = sbr.rel (0) target = $region5
  $region4: #{tpu_custom_call.1} parent=0 // pred_region
    _
  $region5: #{tpu_custom_call.1} parent=0 // pred_fallthru
    _
  // Predicated region
  $region6: #{tpu_custom_call.1} parent=0 // pred_check
    _
  $region7: #{tpu_custom_call.1} parent=0 // pred_check_branch
    %16 = sbr.rel (0) target = $region9
  $region8: #{tpu_custom_call.1} parent=0 // pred_region
    _
  $region9: #{tpu_custom_call.1} parent=0 // pred_fallthru
    _
  // Predicated region
  $region10: #{tpu_custom_call.1} parent=0 // pred_check
    _
  $region11: #{tpu_custom_call.1} parent=0 // pred_check_branch
    %18 = sbr.rel (0) target = $region13
  $region12: #{tpu_custom_call.1} parent=0 // pred_region
    _
  $region13: #{tpu_custom_call.1} parent=0 // pred_fallthru
    _
  // Predicated region
  $region14: #{tpu_custom_call.1} parent=0 // pred_check
    _
  $region15: #{tpu_custom_call.1} parent=0 // pred_check_branch
    %20 = sbr.rel (0) target = $region17
  $region16: #{tpu_custom_call.1} parent=0 // pred_region
    _
  $region17: #{tpu_custom_call.1} parent=0 // pred_fallthru
    _
  // Predicated region
  $region18: #{tpu_custom_call.1} parent=0 // pred_check
    _
  $region19: #{tpu_custom_call.1} parent=0 // pred_check_branch
    %22 = sbr.rel (0) target = $region21
  $region20: #{tpu_custom_call.1} parent=0 // pred_region
    _
  $region21: #{tpu_custom_call.1} parent=0 // pred_fallthru
    _
  // Predicated region
  $region22: #{tpu_custom_call.1} parent=0 // pred_check
    _
  $region23: #{tpu_custom_call.1} parent=0 // pred_check_branch
    %24 = sbr.rel (0) target = $region25
  $region24: #{tpu_custom_call.1} parent=0 // pred_region
    _
  $region25: #{tpu_custom_call.1} parent=0 // pred_fallthru
    _
  // Predicated region
  $region26: #{tpu_custom_call.1} parent=0 // pred_check
    _
  $region27: #{tpu_custom_call.1} parent=0 // pred_check_branch
    %26 = sbr.rel (0) target = $region29
  $region28: #{tpu_custom_call.1} parent=0 // pred_region
    _
  $region29: #{tpu_custom_call.1} parent=0 // pred_fallthru
    _
  %p27 = scmp.eq.s32.totalorder 0, 0
  // Predicated region
  $region30: #{tpu_custom_call.1} parent=0 // pred_check
    %p28 = pneg %p27
  $region31: #{tpu_custom_call.1} parent=0 // pred_check_branch
    %30 = sbr.rel (%p28) target = $region33
  $region32: #{tpu_custom_call.1} parent=0 // pred_region
    %vm31 = vcmask 254976
    %32 = vst.msk [vmem:[#allocation2] sm:$0x3] %vm31, 0.0
  $region33: #{tpu_custom_call.1} parent=0 // pred_fallthru
    _
  %v33 = vld [vmem:[#allocation2] sm:$0x3]
  %v34 = vld [vmem:[%s0] sm:$0x3]
  %v35 = vld [vmem:[%s2] sm:$0xff]
  %v36 = vld [vmem:[%s2 + $0x8] sm:$0xff]
  %v37 = vld [vmem:[%s2 + $0x10] sm:$0xff]
  %v38 = vld [vmem:[%s2 + $0x18] sm:$0xff]
  %v39 = vld [vmem:[%s2 + $0x20] sm:$0xff]
  %v40 = vld [vmem:[%s2 + $0x28] sm:$0xff]
  %v41 = vld [vmem:[%s2 + $0x30] sm:$0xff]
  %v42 = vld [vmem:[%s2 + $0x38] sm:$0xff]
  %vm43 = vcmask 523264
  %v45 = vsel %vm43, %v34, 0
  %47 = vmatpush.msra.mxu0 0.0
  %48 = vmatpush.msra.mxu0 0.0
  %49 = vmatpush.msra.mxu0 0.0
  %50 = vmatpush.msra.mxu0 0.0
  %51 = vmatpush.msra.mxu0 0.0
  %52 = vmatpush.msra.mxu0 0.0
  %53 = vmatpush.msra.mxu0 0.0
  %54 = vmatpush.msra.mxu0 0.0
  %55 = vmatpush.msra.mxu0 %v42
  %56 = vmatpush.msra.mxu0 %v41
  %57 = vmatpush.msra.mxu0 %v40
  %58 = vmatpush.msra.mxu0 %v39
  %59 = vmatpush.msra.mxu0 %v38
  %60 = vmatpush.msra.mxu0 %v37
  %61 = vmatpush.msra.mxu0 %v36
  %62 = vmatpush.msra.mxu0 %v35
  %63 = vmatmul.f32.gmra.mxu0 %v45
  %v64 = vpop.f32.mrf.mxu0
  %v65 = vadd.f32 0.0, %v64
  %66 = vdwg.mxu0
  %v67 = vadd.f32 %v33, %v65
  %vm68 = vcmask 254976
  %69 = vst.msk [vmem:[#allocation2] sm:$0x3] %vm68, %v67
  // Predicated region
  $region34: #{tpu_custom_call.1} parent=0 // pred_check
    %p70 = pneg %p27
  $region35: #{tpu_custom_call.1} parent=0 // pred_check_branch
    %72 = sbr.rel (%p70) target = $region37
  $region36: #{tpu_custom_call.1} parent=0 // pred_region
    %v73 = vld [vmem:[#allocation2] sm:$0x3]
    %v74 = vld [vmem:[%s3] sm:$0xff]
    %v75 = vld [vmem:[%s3 + $0x8] sm:$0xff]
    %v76 = vld [vmem:[%s3 + $0x10] sm:$0xff]
    %v77 = vld [vmem:[%s3 + $0x18] sm:$0xff]
    %v78 = vld [vmem:[%s1] sm:$0x3]
    %v79 = vld [vmem:[%s4] sm:$0xf]
    %vm80 = vcmask 31744
    %v82 = vsel %vm80, %v78, 0
    %vm84 = vcmask 1043456
    %v86 = vsel %vm84, %v79, 0
    %88 = vmatpush.msra.mxu0 0.0
    %89 = vmatpush.msra.mxu0 0.0
    %90 = vmatpush.msra.mxu0 0.0
    %91 = vmatpush.msra.mxu0 0.0
    %92 = vmatpush.msra.mxu0 0.0
    %93 = vmatpush.msra.mxu0 0.0
    %94 = vmatpush.msra.mxu0 0.0
    %95 = vmatpush.msra.mxu0 0.0
    %96 = vmatpush.msra.mxu0 0.0
    %97 = vmatpush.msra.mxu0 0.0
    %98 = vmatpush.msra.mxu0 0.0
    %99 = vmatpush.msra.mxu0 0.0
    %100 = vmatpush.msra.mxu0 0.0
    %101 = vmatpush.msra.mxu0 0.0
    %102 = vmatpush.msra.mxu0 0.0
    %103 = vmatpush.msra.mxu0 %v86
    %104 = vmatmul.f32.gmra.mxu0 %v82
    %v105 = vpop.f32.mrf.mxu0
    %v106 = vadd.f32 0.0, %v105
    %107 = vdwg.mxu0
    %vm108 = vcmask 261120
    %v110 = vsel %vm108, %v73, 0
    %112 = vmatpush.msra.mxu0 0.0
    %113 = vmatpush.msra.mxu0 0.0
    %114 = vmatpush.msra.mxu0 0.0
    %115 = vmatpush.msra.mxu0 0.0
    %116 = vmatpush.msra.mxu0 0.0
    %117 = vmatpush.msra.mxu0 0.0
    %118 = vmatpush.msra.mxu0 0.0
    %119 = vmatpush.msra.mxu0 0.0
    %120 = vmatpush.msra.mxu0 0.0
    %121 = vmatpush.msra.mxu0 0.0
    %122 = vmatpush.msra.mxu0 0.0
    %123 = vmatpush.msra.mxu0 0.0
    %124 = vmatpush.msra.mxu0 %v77
    %125 = vmatpush.msra.mxu0 %v76
    %126 = vmatpush.msra.mxu0 %v75
    %127 = vmatpush.msra.mxu0 %v74
    %128 = vmatmul.f32.gmra.mxu0 %v110
    %v129 = vpop.f32.mrf.mxu0
    %v130 = vadd.f32 %v106, %v129
    %131 = vdwg.mxu0
    %v132 = vld [vmem:[%s5] sm:$0xff]
    %s133 = sld [smem:[#allocation3]]
    %v134 = vstv %s133
    %vm135 = vcmask 64512
    %v137 = vsel %vm135, %v130, 0
    %139 = vmatpush.msra.mxu0 0.0
    %140 = vmatpush.msra.mxu0 0.0
    %141 = vmatpush.msra.mxu0 0.0
    %142 = vmatpush.msra.mxu0 0.0
    %143 = vmatpush.msra.mxu0 0.0
    %144 = vmatpush.msra.mxu0 0.0
    %145 = vmatpush.msra.mxu0 0.0
    %146 = vmatpush.msra.mxu0 0.0
    %147 = vmatpush.msra.mxu0 0.0
    %148 = vmatpush.msra.mxu0 0.0
    %149 = vmatpush.msra.mxu0 0.0
    %150 = vmatpush.msra.mxu0 0.0
    %151 = vmatpush.msra.mxu0 0.0
    %152 = vmatpush.msra.mxu0 0.0
    %153 = vmatpush.msra.mxu0 0.0
    %154 = vmatpush.msra.mxu0 %v132
    %155 = vmatmul.f32.gmra.mxu0 %v137
    %v156 = vpop.f32.mrf.mxu0
    %v157 = vadd.f32 %v134, %v156
    %158 = vdwg.mxu0
    %vm159 = vcmask 1024
    %160 = vst.msk [vmem:[%s7] sm:$0x3] %vm159, %v157
  $region37: #{tpu_custom_call.1} parent=0 // pred_fallthru
    _
  // Predicated region
  $region38: #{tpu_custom_call.1} parent=0 // pred_check
    _
  $region39: #{tpu_custom_call.1} parent=0 // pred_check_branch
    %162 = sbr.rel (0) target = $region41
  $region40: #{tpu_custom_call.1} parent=0 // pred_region
    _
  $region41: #{tpu_custom_call.1} parent=0 // pred_fallthru
    _
  // Predicated region
  $region42: #{tpu_custom_call.1} parent=0 // pred_check
    _
  $region43: #{tpu_custom_call.1} parent=0 // pred_check_branch
    %164 = sbr.rel (0) target = $region45
  $region44: #{tpu_custom_call.1} parent=0 // pred_region
    _
  $region45: #{tpu_custom_call.1} parent=0 // pred_fallthru
    _

</llo_original>
